<compile_context>
chip_gen: v5e
topology: v5e:2x2
jax: 0.10.0
libtpu: 0.0.40
codegen_flags: <defaults>
</compile_context>

<pallas_src>
import functools

import jax
import jax.numpy as jnp
from jax.experimental import pallas as pl
from jax.experimental.pallas import tpu as pltpu


VMEM_LIMIT = 48 * 1024 * 1024
CPARAMS = pltpu.CompilerParams(
    dimension_semantics=("parallel", "parallel"),
    vmem_limit_bytes=VMEM_LIMIT,
)


# ---------------------------------------------------------------------------
# BlockSpec helpers
# ---------------------------------------------------------------------------
def _plane_spec(hp_, c, wp_, k):
    """Full (Hp, C, Wp) plane at depth (grid_d + k)."""
    return pl.BlockSpec((None, None, hp_, c, wp_),
                        lambda n, d: (n, d + k, 0, 0, 0))


def _plane_spec_s2(hp_, c, wp_, k):
    """Full (Hp, C, Wp) plane at depth (2*grid_d + k) for stride-2 convs."""
    return pl.BlockSpec((None, None, hp_, c, wp_),
                        lambda n, d: (n, 2 * d + k, 0, 0, 0))


def _weight_spec(w):
    return pl.BlockSpec(w.shape, lambda n, d: (0, 0))


def _out_spec(h, c, w):
    return pl.BlockSpec((None, None, h, c, w), lambda n, d: (n, d, 0, 0, 0))


# ---------------------------------------------------------------------------
# Kernels
# ---------------------------------------------------------------------------
def _dual_conv_kernel(p0, p1, p2, p3, p4, wn_ref, wd_ref, mul_ref, add_ref):
    """normconv (pad 1) + dilaconv (pad 2, dil 2) sharing the same 5 padded
    input depth planes, with the relu(a*b)/relu(a+b) epilogue fused."""
    H, Cout, W = mul_ref.shape
    wn = wn_ref[...]
    wd = wd_ref[...]
    nplanes = (p1, p2, p3)   # normconv depth taps (pad-2 frame offsets 1,2,3)
    dplanes = (p0, p2, p4)   # dilaconv depth taps (offsets 0,2,4)

    def row(h, carry):
        nrows = [nplanes[kd][h + 1 + kh] for kd in range(3) for kh in range(3)]
        drows = [dplanes[kd][h + 2 * kh] for kd in range(3) for kh in range(3)]
        qn = jnp.concatenate(nrows, axis=0)                       # (9C, Wp)
        qd = jnp.concatenate(drows, axis=0)
        rn = jnp.concatenate([qn[:, 1 + kw:1 + kw + W] for kw in range(3)], axis=0)
        rd = jnp.concatenate([qd[:, 2 * kw:2 * kw + W] for kw in range(3)], axis=0)
        a = jnp.dot(wn, rn, preferred_element_type=jnp.float32)   # (Cout, W)
        b = jnp.dot(wd, rd, preferred_element_type=jnp.float32)
        mul_ref[h] = jnp.maximum(a * b, 0.0)
        add_ref[h] = jnp.maximum(a + b, 0.0)
        return carry

    jax.lax.fori_loop(0, H, row, 0)


def _fuse_conv_kernel(m0, m1, m2, a0, a1, a2, w_ref, o_ref):
    """fuseconv (pad 0) reading mulx / addx directly (no concat materialized)."""
    Hout, Cout, Wout = o_ref.shape
    wf = w_ref[...]
    mp = (m0, m1, m2)
    ap = (a0, a1, a2)

    def row(h, carry):
        rows = []
        for kd in range(3):
            for kh in range(3):
                rows.append(mp[kd][h + kh])
                rows.append(ap[kd][h + kh])
        q = jnp.concatenate(rows, axis=0)                         # (18C, W)
        rhs = jnp.concatenate([q[:, kw:kw + Wout] for kw in range(3)], axis=0)
        o_ref[h] = jnp.dot(wf, rhs, preferred_element_type=jnp.float32)
        return carry

    jax.lax.fori_loop(0, Hout, row, 0)


def _make_conv1_kernel(has_res, apply_sigmoid):
    """3x3x3 / pad 1 / stride 1 conv, optional residual add and sigmoid."""
    def kernel(*refs):
        if has_res:
            p0, p1, p2, w_ref, res_ref, o_ref = refs
        else:
            p0, p1, p2, w_ref, o_ref = refs
            res_ref = None
        H, Cout, W = o_ref.shape
        wt = w_ref[...]
        planes = (p0, p1, p2)

        def row(h, carry):
            rows = [planes[kd][h + kh] for kd in range(3) for kh in range(3)]
            q = jnp.concatenate(rows, axis=0)
            rhs = jnp.concatenate([q[:, kw:kw + W] for kw in range(3)], axis=0)
            out = jnp.dot(wt, rhs, preferred_element_type=jnp.float32)
            if has_res:
                out = out + res_ref[h]
            if apply_sigmoid:
                out = 1.0 / (1.0 + jnp.exp(-out))
            o_ref[h] = out
            return carry

        jax.lax.fori_loop(0, H, row, 0)

    return kernel


def _down_conv_kernel(p0, p1, p2, w_ref, o_ref):
    """3x3x3 / pad 1 / stride 2 conv: strides D (grid index_map) and H (in-kernel)
    directly; only the W subsample happens outside the kernel."""
    Hout, Cout, W = o_ref.shape
    wt = w_ref[...]
    planes = (p0, p1, p2)

    def row(ho, carry):
        rows = [planes[kd][2 * ho + kh] for kd in range(3) for kh in range(3)]
        q = jnp.concatenate(rows, axis=0)
        rhs = jnp.concatenate([q[:, kw:kw + W] for kw in range(3)], axis=0)
        o_ref[ho] = jnp.dot(wt, rhs, preferred_element_type=jnp.float32)
        return carry

    jax.lax.fori_loop(0, Hout, row, 0)


# ---------------------------------------------------------------------------
# Pallas wrappers (jitted so each distinct shape compiles exactly once)
# ---------------------------------------------------------------------------
@jax.jit
def dual_conv(hp, wn_flat, wd_flat):
    N, Dp, Hp, C, Wp = hp.shape
    D, H, W = Dp - 4, Hp - 4, Wp - 4
    Cout = wn_flat.shape[0]
    out_sds = jax.ShapeDtypeStruct((N, D, H, Cout, W), jnp.float32)
    ospec = _out_spec(H, Cout, W)
    return pl.pallas_call(
        _dual_conv_kernel,
        grid=(N, D),
        in_specs=[_plane_spec(Hp, C, Wp, k) for k in range(5)]
        + [_weight_spec(wn_flat), _weight_spec(wd_flat)],
        out_specs=(ospec, ospec),
        out_shape=(out_sds, out_sds),
        compiler_params=CPARAMS,
    )(hp, hp, hp, hp, hp, wn_flat, wd_flat)


@jax.jit
def fuse_conv(mulx, addx, wf_flat):
    N, D, H, C, W = mulx.shape
    Dout, Hout, Wout = D - 2, H - 2, W - 2
    Cout = wf_flat.shape[0]
    return pl.pallas_call(
        _fuse_conv_kernel,
        grid=(N, Dout),
        in_specs=[_plane_spec(H, C, W, k) for k in range(3)]
        + [_plane_spec(H, C, W, k) for k in range(3)]
        + [_weight_spec(wf_flat)],
        out_specs=_out_spec(Hout, Cout, Wout),
        out_shape=jax.ShapeDtypeStruct((N, Dout, Hout, Cout, Wout), jnp.float32),
        compiler_params=CPARAMS,
    )(mulx, mulx, mulx, addx, addx, addx, wf_flat)


def _conv1_impl(x, w_flat, res, apply_sigmoid):
    xp = jnp.pad(x, ((0, 0), (1, 1), (1, 1), (0, 0), (1, 1)))
    N, Dp, Hp, C, Wp = xp.shape
    D, H, W = Dp - 2, Hp - 2, Wp - 2
    Cout = w_flat.shape[0]
    io_spec = _out_spec(H, Cout, W)
    in_specs = [_plane_spec(Hp, C, Wp, k) for k in range(3)] + [_weight_spec(w_flat)]
    args = [xp, xp, xp, w_flat]
    if res is not None:
        in_specs.append(io_spec)
        args.append(res)
    return pl.pallas_call(
        _make_conv1_kernel(res is not None, apply_sigmoid),
        grid=(N, D),
        in_specs=in_specs,
        out_specs=io_spec,
        out_shape=jax.ShapeDtypeStruct((N, D, H, Cout, W), jnp.float32),
        compiler_params=CPARAMS,
    )(*args)


@jax.jit
def conv3x3(x, w_flat):
    return _conv1_impl(x, w_flat, None, False)


@jax.jit
def conv3x3_res(x, w_flat, res):
    return _conv1_impl(x, w_flat, res, False)


@jax.jit
def conv3x3_sigmoid(x, w_flat):
    return _conv1_impl(x, w_flat, None, True)


@jax.jit
def down_conv(x, w_flat):
    xp = jnp.pad(x, ((0, 0), (1, 1), (1, 1), (0, 0), (1, 1)))
    N, Dp, Hp, C, Wp = xp.shape
    D, H, W = Dp - 2, Hp - 2, Wp - 2
    Dout, Hout = (D + 1) // 2, (H + 1) // 2
    Cout = w_flat.shape[0]
    y = pl.pallas_call(
        _down_conv_kernel,
        grid=(N, Dout),
        in_specs=[_plane_spec_s2(Hp, C, Wp, k) for k in range(3)]
        + [_weight_spec(w_flat)],
        out_specs=_out_spec(Hout, Cout, W),
        out_shape=jax.ShapeDtypeStruct((N, Dout, Hout, Cout, W), jnp.float32),
        compiler_params=CPARAMS,
    )(xp, xp, xp, w_flat)
    return y[..., ::2]          # W subsample (D/H already strided in-kernel)


# ---------------------------------------------------------------------------
# Plain-JAX glue
# ---------------------------------------------------------------------------
@jax.jit
def gn_relu_pad2(x, gamma, beta):
    """GroupNorm(8, C) + ReLU, then zero-pad D/H/W by 2 for the dual-conv kernel."""
    N, D, H, C, W = x.shape
    G = 8
    cg = C // G
    xg = x.reshape(N, D, H, G, cg, W)
    mean = jnp.mean(xg, axis=(1, 2, 4, 5))                    # (N, G)
    var = jnp.var(xg, axis=(1, 2, 4, 5))                      # biased, like PyTorch
    rstd = jax.lax.rsqrt(var + 1e-5)
    scale = jnp.repeat(rstd, cg, axis=1) * gamma[None, :]     # (N, C)
    shift = beta[None, :] - jnp.repeat(mean, cg, axis=1) * scale
    h = jnp.maximum(x * scale[:, None, None, :, None]
                    + shift[:, None, None, :, None], 0.0)
    return jnp.pad(h, ((0, 0), (2, 2), (2, 2), (0, 0), (2, 2)))


# TODO(synk): F.interpolate(trilinear, align_corners=False) is a data-dependent
# gather; kept as a separable gather+lerp in plain JAX glue.
def _linear_resize_axis(x, axis, out_size):
    in_size = x.shape[axis]
    if in_size == out_size:
        return x
    scale = in_size / out_size
    coords = (jnp.arange(out_size, dtype=jnp.float32) + 0.5) * scale - 0.5
    coords = jnp.maximum(coords, 0.0)                 # PyTorch clamps negatives to 0
    i0 = jnp.clip(jnp.floor(coords).astype(jnp.int32), 0, in_size - 1)
    i1 = jnp.minimum(i0 + 1, in_size - 1)
    w1 = coords - i0.astype(jnp.float32)
    shape = [1] * x.ndim
    shape[axis] = out_size
    w1 = w1.reshape(shape)
    x0 = jnp.take(x, i0, axis=axis)
    x1 = jnp.take(x, i1, axis=axis)
    return x0 * (1.0 - w1) + x1 * w1


@functools.partial(jax.jit, static_argnums=(1,))
def resize_to(x, out_spatial):
    for axis, s in zip((1, 2, 4), out_spatial):
        x = _linear_resize_axis(x, axis, s)
    return x


# ---------------------------------------------------------------------------
# Model
# ---------------------------------------------------------------------------
def basic_block(x, bp):
    hp = gn_relu_pad2(x, bp['gn_w'], bp['gn_b'])
    mulx, addx = dual_conv(hp, bp['wn'], bp['wd'])
    out = fuse_conv(mulx, addx, bp['wf'])
    # TODO(synk): Dropout3d(0.6) is stochastic in train mode; eval-mode identity here.
    # skip=False in HDCUnet defaults -> no residual add inside the block.
    return out


def run_blocks(x, block_params):
    for bp in block_params:
        x = basic_block(x, bp)
    return x


def _flatten_w(w):
    """(Cout, Cin, kd, kh, kw) -> (Cout, 27*Cin) with tap order (kw, kd, kh, cin)."""
    return jnp.transpose(w, (0, 4, 2, 3, 1)).reshape(w.shape[0], -1)


def _conv_w(key, cin, cout, pad_cin_to=None):
    std = (cin * 27.0) ** -0.5
    w = std * jax.random.normal(key, (cout, cin, 3, 3, 3), jnp.float32)
    if pad_cin_to is not None and pad_cin_to > cin:
        # zero weights for zero-padded input channels -> identical function
        w = jnp.pad(w, ((0, 0), (0, pad_cin_to - cin), (0, 0), (0, 0), (0, 0)))
    return _flatten_w(w)


def _bb_params(key, cin, cout):
    k1, k2, k3 = jax.random.split(key, 3)
    return {
        'gn_w': jnp.ones((cin,), jnp.float32),    # PyTorch GroupNorm default affine init
        'gn_b': jnp.zeros((cin,), jnp.float32),
        'wn': _conv_w(k1, cin, cout),
        'wd': _conv_w(k2, cin, cout),
        'wf': _conv_w(k3, 2 * cout, cout),
    }


def init_params(key, in_ch=4, out_ch=4, ic=8):
    keys = iter(jax.random.split(key, 64))
    nk = lambda: next(keys)

    def blocks(n, c):
        return [_bb_params(nk(), c, c) for _ in range(n)]

    return {
        'initconv': _conv_w(nk(), in_ch, ic, pad_cin_to=8),
        'level1': blocks(2, ic),
        'level1_down': _conv_w(nk(), ic, 2 * ic),
        'level2': blocks(2, 2 * ic),
        'level2_down': _conv_w(nk(), 2 * ic, 4 * ic),
        'level3': blocks(3, 4 * ic),
        'level3_down': _conv_w(nk(), 4 * ic, 8 * ic),
        'level4': blocks(3, 8 * ic),
        'level4_down': _conv_w(nk(), 8 * ic, 16 * ic),
        'flat': blocks(3, 16 * ic),
        'level4_up_conv': _conv_w(nk(), 16 * ic, 8 * ic),
        'level4_up': blocks(3, 8 * ic),
        'level3_up_conv': _conv_w(nk(), 8 * ic, 4 * ic),
        'level3_up': blocks(3, 4 * ic),
        'level2_up_conv': _conv_w(nk(), 4 * ic, 2 * ic),
        'level2_up': blocks(2, 2 * ic),
        'level1_up_conv': _conv_w(nk(), 2 * ic, ic),
        'level1_up': blocks(2, ic),
        'finalconv': _conv_w(nk(), ic, out_ch),
    }


def hdc_unet_forward(params, x_ncdhw):
    # NCDHW -> (N, D, H, C, W); pad input channels 4 -> 8 (matching zero-padded
    # initconv weights) so the sublane dim is 8-aligned inside the kernels.
    x = jnp.transpose(x_ncdhw, (0, 2, 3, 1, 4)).astype(jnp.float32)
    x = jnp.pad(x, ((0, 0), (0, 0), (0, 0), (0, 4), (0, 0)))

    x = conv3x3(x, params['initconv'])
    l1x = run_blocks(x, params['level1'])
    l1d = down_conv(l1x, params['level1_down'])
    l2x = run_blocks(l1d, params['level2'])
    l2d = down_conv(l2x, params['level2_down'])
    l3x = run_blocks(l2d, params['level3'])
    l3d = down_conv(l3x, params['level3_down'])
    l4x = run_blocks(l3d, params['level4'])
    l4d = down_conv(l4x, params['level4_down'])
    l4d = run_blocks(l4d, params['flat'])

    def spatial(t):
        return (t.shape[1], t.shape[2], t.shape[4])

    out = resize_to(l4d, spatial(l4x))
    out = conv3x3_res(out, params['level4_up_conv'], l4x)
    out = run_blocks(out, params['level4_up'])

    out = resize_to(out, spatial(l3x))
    out = conv3x3_res(out, params['level3_up_conv'], l3x)
    out = run_blocks(out, params['level3_up'])

    out = resize_to(out, spatial(l2x))
    out = conv3x3_res(out, params['level2_up_conv'], l2x)
    out = run_blocks(out, params['level2_up'])

    out = resize_to(out, spatial(l1x))
    out = conv3x3_res(out, params['level1_up_conv'], l1x)
    out = run_blocks(out, params['level1_up'])

    out = conv3x3_sigmoid(out, params['finalconv'])

    # (N, D, H, C, W) -> NCDHW
    return jnp.transpose(out, (0, 3, 1, 2, 4))


# ---------------------------------------------------------------------------
if __name__ == "__main__":
    key = jax.random.PRNGKey(0)
    pkey, xkey = jax.random.split(key)

    # init_channels=8 is the smallest value divisible by the 8 GroupNorm groups.
    # Spatial 181 is the architectural minimum: every padding-0 fuseconv shrinks
    # each level by 2 and four stride-2 downsamplings must still leave >=3 voxels
    # for the `flat` blocks.
    IC = 8
    S = 181
    params = init_params(pkey, in_ch=4, out_ch=4, ic=IC)
    x = jax.random.normal(xkey, (1, 4, S, S, S), jnp.float32)

    out = hdc_unet_forward(params, x)
    out = jax.block_until_ready(out)

    assert out.shape == (1, 4, 173, 173, 173), out.shape
    assert bool(jnp.isfinite(out).all())
    print("KERNEL_OK")
</pallas_src>

<mosaic_0001>
module attributes {stable_mosaic.version = 11 : i64} {
  func.func @kernel(%arg0: i32, %arg1: i32, %arg2: memref<1x1x183x8x183xf32, #tpu.memory_space<vmem>>, %arg3: memref<1x1x183x8x183xf32, #tpu.memory_space<vmem>>, %arg4: memref<1x1x183x8x183xf32, #tpu.memory_space<vmem>>, %arg5: memref<8x216xf32, #tpu.memory_space<vmem>>, %arg6: memref<1x1x181x8x181xf32, #tpu.memory_space<vmem>>) attributes {dimension_semantics = [#tpu.dimension_semantics<parallel>, #tpu.dimension_semantics<parallel>], iteration_bounds = array<i64: 1, 181>, scalar_prefetch = 0 : i64, scratch_operands = 0 : i64, tpu.core_type = #tpu.core_type<tc>, window_params = [{transform_indices = @transform_0, window_bounds = array<i64: 1, 1, 183, 8, 183>}, {transform_indices = @transform_1, window_bounds = array<i64: 1, 1, 183, 8, 183>}, {transform_indices = @transform_2, window_bounds = array<i64: 1, 1, 183, 8, 183>}, {pipeline_mode = #tpu.pipeline_mode<synchronous>, transform_indices = @transform_3, window_bounds = array<i64: 8, 216>}, {transform_indices = @transform_4, window_bounds = array<i64: 1, 1, 181, 8, 181>}]} {
    %c0 = arith.constant 0 : index
    %c0_0 = arith.constant 0 : index
    %0 = vector.load %arg5[%c0, %c0_0] : memref<8x216xf32, #tpu.memory_space<vmem>>, vector<8x216xf32>
    %c0_i32 = arith.constant 0 : i32
    %c181_i32 = arith.constant 181 : i32
    %1 = arith.addi %c0_i32, %c181_i32 : i32
    %c1_i32 = arith.constant 1 : i32
    scf.for %arg7 = %c0_i32 to %1 step %c1_i32  : i32 {
      %c0_i32_2 = arith.constant 0 : i32
      %2 = arith.addi %arg7, %c0_i32_2 : i32
      %c0_3 = arith.constant 0 : index
      %c0_4 = arith.constant 0 : index
      %3 = arith.index_cast %2 : i32 to index
      %c0_5 = arith.constant 0 : index
      %c0_6 = arith.constant 0 : index
      %4 = vector.load %arg2[%c0_3, %c0_4, %3, %c0_5, %c0_6] : memref<1x1x183x8x183xf32, #tpu.memory_space<vmem>>, vector<1x1x1x8x183xf32>
      %5 = vector.shape_cast %4 : vector<1x1x1x8x183xf32> to vector<8x183xf32>
      %c1_i32_7 = arith.constant 1 : i32
      %6 = arith.addi %arg7, %c1_i32_7 : i32
      %c0_8 = arith.constant 0 : index
      %c0_9 = arith.constant 0 : index
      %7 = arith.index_cast %6 : i32 to index
      %c0_10 = arith.constant 0 : index
      %c0_11 = arith.constant 0 : index
      %8 = vector.load %arg2[%c0_8, %c0_9, %7, %c0_10, %c0_11] : memref<1x1x183x8x183xf32, #tpu.memory_space<vmem>>, vector<1x1x1x8x183xf32>
      %9 = vector.shape_cast %8 : vector<1x1x1x8x183xf32> to vector<8x183xf32>
      %c2_i32 = arith.constant 2 : i32
      %10 = arith.addi %arg7, %c2_i32 : i32
      %c0_12 = arith.constant 0 : index
      %c0_13 = arith.constant 0 : index
      %11 = arith.index_cast %10 : i32 to index
      %c0_14 = arith.constant 0 : index
      %c0_15 = arith.constant 0 : index
      %12 = vector.load %arg2[%c0_12, %c0_13, %11, %c0_14, %c0_15] : memref<1x1x183x8x183xf32, #tpu.memory_space<vmem>>, vector<1x1x1x8x183xf32>
      %13 = vector.shape_cast %12 : vector<1x1x1x8x183xf32> to vector<8x183xf32>
      %c0_i32_16 = arith.constant 0 : i32
      %14 = arith.addi %arg7, %c0_i32_16 : i32
      %c0_17 = arith.constant 0 : index
      %c0_18 = arith.constant 0 : index
      %15 = arith.index_cast %14 : i32 to index
      %c0_19 = arith.constant 0 : index
      %c0_20 = arith.constant 0 : index
      %16 = vector.load %arg3[%c0_17, %c0_18, %15, %c0_19, %c0_20] : memref<1x1x183x8x183xf32, #tpu.memory_space<vmem>>, vector<1x1x1x8x183xf32>
      %17 = vector.shape_cast %16 : vector<1x1x1x8x183xf32> to vector<8x183xf32>
      %c1_i32_21 = arith.constant 1 : i32
      %18 = arith.addi %arg7, %c1_i32_21 : i32
      %c0_22 = arith.constant 0 : index
      %c0_23 = arith.constant 0 : index
      %19 = arith.index_cast %18 : i32 to index
      %c0_24 = arith.constant 0 : index
      %c0_25 = arith.constant 0 : index
      %20 = vector.load %arg3[%c0_22, %c0_23, %19, %c0_24, %c0_25] : memref<1x1x183x8x183xf32, #tpu.memory_space<vmem>>, vector<1x1x1x8x183xf32>
      %21 = vector.shape_cast %20 : vector<1x1x1x8x183xf32> to vector<8x183xf32>
      %c2_i32_26 = arith.constant 2 : i32
      %22 = arith.addi %arg7, %c2_i32_26 : i32
      %c0_27 = arith.constant 0 : index
      %c0_28 = arith.constant 0 : index
      %23 = arith.index_cast %22 : i32 to index
      %c0_29 = arith.constant 0 : index
      %c0_30 = arith.constant 0 : index
      %24 = vector.load %arg3[%c0_27, %c0_28, %23, %c0_29, %c0_30] : memref<1x1x183x8x183xf32, #tpu.memory_space<vmem>>, vector<1x1x1x8x183xf32>
      %25 = vector.shape_cast %24 : vector<1x1x1x8x183xf32> to vector<8x183xf32>
      %c0_i32_31 = arith.constant 0 : i32
      %26 = arith.addi %arg7, %c0_i32_31 : i32
      %c0_32 = arith.constant 0 : index
      %c0_33 = arith.constant 0 : index
      %27 = arith.index_cast %26 : i32 to index
      %c0_34 = arith.constant 0 : index
      %c0_35 = arith.constant 0 : index
      %28 = vector.load %arg4[%c0_32, %c0_33, %27, %c0_34, %c0_35] : memref<1x1x183x8x183xf32, #tpu.memory_space<vmem>>, vector<1x1x1x8x183xf32>
      %29 = vector.shape_cast %28 : vector<1x1x1x8x183xf32> to vector<8x183xf32>
      %c1_i32_36 = arith.constant 1 : i32
      %30 = arith.addi %arg7, %c1_i32_36 : i32
      %c0_37 = arith.constant 0 : index
      %c0_38 = arith.constant 0 : index
      %31 = arith.index_cast %30 : i32 to index
      %c0_39 = arith.constant 0 : index
      %c0_40 = arith.constant 0 : index
      %32 = vector.load %arg4[%c0_37, %c0_38, %31, %c0_39, %c0_40] : memref<1x1x183x8x183xf32, #tpu.memory_space<vmem>>, vector<1x1x1x8x183xf32>
      %33 = vector.shape_cast %32 : vector<1x1x1x8x183xf32> to vector<8x183xf32>
      %c2_i32_41 = arith.constant 2 : i32
      %34 = arith.addi %arg7, %c2_i32_41 : i32
      %c0_42 = arith.constant 0 : index
      %c0_43 = arith.constant 0 : index
      %35 = arith.index_cast %34 : i32 to index
      %c0_44 = arith.constant 0 : index
      %c0_45 = arith.constant 0 : index
      %36 = vector.load %arg4[%c0_42, %c0_43, %35, %c0_44, %c0_45] : memref<1x1x183x8x183xf32, #tpu.memory_space<vmem>>, vector<1x1x1x8x183xf32>
      %37 = vector.shape_cast %36 : vector<1x1x1x8x183xf32> to vector<8x183xf32>
      %38 = tpu.concatenate %5, %9, %13, %17, %21, %25, %29, %33, %37 in 0 : vector<8x183xf32>, vector<8x183xf32>, vector<8x183xf32>, vector<8x183xf32>, vector<8x183xf32>, vector<8x183xf32>, vector<8x183xf32>, vector<8x183xf32>, vector<8x183xf32> -> vector<72x183xf32>
      %39 = vector.extract_strided_slice %38 {offsets = [0, 0], sizes = [72, 181], strides = [1, 1]} : vector<72x183xf32> to vector<72x181xf32>
      %40 = vector.extract_strided_slice %38 {offsets = [0, 1], sizes = [72, 181], strides = [1, 1]} : vector<72x183xf32> to vector<72x181xf32>
      %41 = vector.extract_strided_slice %38 {offsets = [0, 2], sizes = [72, 181], strides = [1, 1]} : vector<72x183xf32> to vector<72x181xf32>
      %42 = tpu.concatenate %39, %40, %41 in 0 : vector<72x181xf32>, vector<72x181xf32>, vector<72x181xf32> -> vector<216x181xf32>
      %cst = arith.constant dense<0.000000e+00> : vector<8x181xf32>
      %43 = tpu.matmul %0, %42, %cst {dimension_numbers = #tpu.dot_dimension_numbers<[1], [0], [0], [1], [0, 0, 1, 1], [], []>} : vector<8x216xf32>, vector<216x181xf32>, vector<8x181xf32> -> vector<8x181xf32>
      %c0_46 = arith.constant 0 : index
      %c0_47 = arith.constant 0 : index
      %44 = arith.index_cast %arg7 : i32 to index
      %c0_48 = arith.constant 0 : index
      %c0_49 = arith.constant 0 : index
      %45 = vector.load %arg6[%c0_46, %c0_47, %44, %c0_48, %c0_49] : memref<1x1x181x8x181xf32, #tpu.memory_space<vmem>>, vector<1x1x1x8x181xf32>
      %46 = vector.shape_cast %45 : vector<1x1x1x8x181xf32> to vector<8x181xf32>
      %47 = vector.shape_cast %43 : vector<8x181xf32> to vector<1x1x1x8x181xf32>
      tpu.vector_store %arg6[%c0_46, %c0_47, %44, %c0_48, %c0_49], %47 {strides = array<i32>} : memref<1x1x181x8x181xf32, #tpu.memory_space<vmem>>, vector<1x1x1x8x181xf32>,
    }
    %c181_i32_1 = arith.constant 181 : i32
    return
  }
  func.func @transform_0(%arg0: i32, %arg1: i32) -> (i32, i32, i32, i32, i32) {
    %c0_i32 = arith.constant 0 : i32
    %0 = arith.addi %arg1, %c0_i32 : i32
    %c0_i32_0 = arith.constant 0 : i32
    %c0_i32_1 = arith.constant 0 : i32
    %c0_i32_2 = arith.constant 0 : i32
    %c0_i32_3 = arith.constant 0 : i32
    return %arg0, %0, %c0_i32_0, %c0_i32_1, %c0_i32_2 : i32, i32, i32, i32, i32
  }
  func.func @transform_1(%arg0: i32, %arg1: i32) -> (i32, i32, i32, i32, i32) {
    %c1_i32 = arith.constant 1 : i32
    %0 = arith.addi %arg1, %c1_i32 : i32
    %c0_i32 = arith.constant 0 : i32
    %c0_i32_0 = arith.constant 0 : i32
    %c0_i32_1 = arith.constant 0 : i32
    %c0_i32_2 = arith.constant 0 : i32
    return %arg0, %0, %c0_i32, %c0_i32_0, %c0_i32_1 : i32, i32, i32, i32, i32
  }
  func.func @transform_2(%arg0: i32, %arg1: i32) -> (i32, i32, i32, i32, i32) {
    %c2_i32 = arith.constant 2 : i32
    %0 = arith.addi %arg1, %c2_i32 : i32
    %c0_i32 = arith.constant 0 : i32
    %c0_i32_0 = arith.constant 0 : i32
    %c0_i32_1 = arith.constant 0 : i32
    %c0_i32_2 = arith.constant 0 : i32
    return %arg0, %0, %c0_i32, %c0_i32_0, %c0_i32_1 : i32, i32, i32, i32, i32
  }
  func.func @transform_3(%arg0: i32, %arg1: i32) -> (i32, i32) {
    %c0_i32 = arith.constant 0 : i32
    %c0_i32_0 = arith.constant 0 : i32
    %c0_i32_1 = arith.constant 0 : i32
    return %c0_i32, %c0_i32_0 : i32, i32
  }
  func.func @transform_4(%arg0: i32, %arg1: i32) -> (i32, i32, i32, i32, i32) {
    %c0_i32 = arith.constant 0 : i32
    %c0_i32_0 = arith.constant 0 : i32
    %c0_i32_1 = arith.constant 0 : i32
    %c0_i32_2 = arith.constant 0 : i32
    return %arg0, %arg1, %c0_i32, %c0_i32_0, %c0_i32_1 : i32, i32, i32, i32, i32
  }
}

</mosaic_0001>

<llo_original>
// kernel: conv3x3.1
$region0: #{conv3x3.1}
  #allocation0 [shape = 'u32[]', space=smem, size = 0x4, offset = 0x4, fixed_abs, tag = 'smem constant byte address 0x4 - core index']
  #allocation1 [shape = 'u32[72,128]{1,0:T(1,128)}', space=vmem, size = 0x9000, scoped, tag = 'internal scratch']
  %s0 = inlined_call_operand.hbm [shape: f32[1,183,183,8,183], index: 0, kind: input, shape index: {}, may-alias: {0,1,2}]
  %s1 = inlined_call_operand.hbm [shape: f32[1,183,183,8,183], index: 1, kind: input, shape index: {}, may-alias: {0,1,2}]
  %s2 = inlined_call_operand.hbm [shape: f32[1,183,183,8,183], index: 2, kind: input, shape index: {}, may-alias: {0,1,2}]
  %s3 = inlined_call_operand.vmem [shape: f32[8,216], index: 3, kind: input, shape index: {}]
  %s4 = inlined_call_operand.hbm [shape: f32[1,181,181,8,181], index: 4, kind: output, shape index: {}]
  %s5 = sld [smem:[#allocation0]]
  $region68: #{conv3x3.1} parent=0
    _
  %s7 = ssub.s32 1, %s5
  %s8 = scalar_select 0, %s7, %s5
  $region1: #{conv3x3.1} parent=0
    #allocation2 [shape = 'u8[2998272]{0}', space=vmem, size = 0x2dc000, scoped, tag = 'input window, operand 0']
    #allocation3 [shape = 's32[2]{0}', space=sflag, size = 0x8, scoped, tag = 'scoped memory for conv3x3.1']
    #allocation4 [shape = 's32[2]{0}', space=sflag, size = 0x8, scoped, tag = 'scoped memory for conv3x3.1']
    #allocation5 [shape = 'u8[2998272]{0}', space=vmem, size = 0x2dc000, scoped, tag = 'input window, operand 1']
    #allocation6 [shape = 's32[2]{0}', space=sflag, size = 0x8, scoped, tag = 'scoped memory for conv3x3.1']
    #allocation7 [shape = 'u8[2998272]{0}', space=vmem, size = 0x2dc000, scoped, tag = 'input window, operand 2']
    #allocation8 [shape = 'u8[2965504]{0}', space=vmem, size = 0x2d4000, scoped, tag = 'output window, operand 0']
    %9 = vsyncpa [#allocation3], 0
    %s10 = scalar_lea.sflag [#allocation3], 1
    %11 = vsyncpa %s10, 0
    %12 = vsyncpa [#allocation6], 0
    %s13 = scalar_lea.sflag [#allocation6], 1
    %14 = vsyncpa %s13, 0
    %15 = vsyncpa [#allocation4], 0
    %s16 = scalar_lea.sflag [#allocation4], 1
    %17 = vsyncpa %s16, 0
    loop: start=0, step=1, limit=183
    $region2: #{conv3x3.1} parent=1 // loop_pre_header
      _
    $region3: #{conv3x3.1} parent=1 // loop_header
      %s19 = sphi 0, %s23
      %p20 = scmp.ge.s32.totalorder %s19, 183
      %s26 = sphi 0, %s38
      %s27 = sphi 0, %s34
      %s28 = sphi 0, %s26
      %s29 = sphi 0, %s27
      %s30 = sphi 0, %s28
      %s31 = sphi 0, %s29
      %s43 = sphi 0, %s45
      %s46 = sphi 0, %s43
      %s47 = sphi 0, %s46
      %s63 = sphi 0, %s47
      %s73 = sphi 0, %s75
      %s76 = sphi 0, %s73
      %s77 = sphi 0, %s76
      %s93 = sphi 0, %s77
      %s103 = sphi 0, %s105
      %s106 = sphi 0, %s103
      %s107 = sphi 0, %s106
      %s123 = sphi 0, %s107
      %s127 = sphi 0, %s127
      %s129 = sphi 0, %s127
      %s130 = sphi 0, %s129
      %s144 = sphi 0, %s130
      %s152 = sphi 0, %s154
      %s155 = sphi 0, %s152
      %s156 = sphi 0, %s155
      %s172 = sphi 0, %s156
    $region4: #{conv3x3.1} parent=1 // loop_header_branch
      %22 = sbr.rel (%p20) target = $region8
    $region5: #{conv3x3.1} parent=1 // loop_body
      %s24 = ssub.s32 %s19, 1
      %s25 = ssub.s32 %s19, 2
      %s32 = sadd.s32 1, %s27
      %p33 = scmp.ge.s32.totalorder %s32, 181
      %s34 = scalar_select %p33, 0, %s32
      %s35 = sadd.s32 1, %s26
      %s36 = scalar_select %p33, %s35, %s26
      %p37 = scmp.ge.s32.totalorder %s36, 1
      %s38 = scalar_select %p37, 0, %s36
      %s39 = ssub.s32 %s26, %s38
      %s40 = ssub.s32 %s27, %s34
      %s41 = sor.u32 %s39, %s40
      %p42 = scmp.eq.s32.totalorder %s41, 0
      %s44 = sadd.s32 %s43, 1
      %s45 = scalar_select %p42, %s43, %s44
      %p48 = pneg %p42
      %p49 = scmp.eq.s32.totalorder %s19, 180
      %p50 = por %p48, %p49
      %p51 = scmp.ne.s32.totalorder %s43, %s46
      %p52 = scmp.eq.s32.totalorder %s19, 0
      %p53 = por %p51, %p52
      %p54 = scmp.ne.s32.totalorder %s43, %s46
      %p55 = scmp.eq.s32.totalorder %s24, 180
      %p56 = por %p54, %p55
      %p57 = scmp.ne.s32.totalorder %s46, %s47
      %p58 = scmp.eq.s32.totalorder %s24, 0
      %p59 = por %p57, %p58
      %p60 = scmp.ne.s32.totalorder %s46, %s47
      %p61 = scmp.eq.s32.totalorder %s25, 180
      %p62 = por %p60, %p61
      %p64 = scmp.ne.s32.totalorder %s47, %s63
      %p65 = scmp.eq.s32.totalorder %s25, 0
      %p66 = por %p64, %p65
      %s67 = sadd.s32 %s27, 1
      %s68 = sadd.s32 %s34, 1
      %s69 = ssub.s32 %s26, %s38
      %s70 = ssub.s32 %s67, %s68
      %s71 = sor.u32 %s69, %s70
      %p72 = scmp.eq.s32.totalorder %s71, 0
      %s74 = sadd.s32 %s73, 1
      %s75 = scalar_select %p72, %s73, %s74
      %p78 = pneg %p72
      %p79 = scmp.eq.s32.totalorder %s19, 180
      %p80 = por %p78, %p79
      %p81 = scmp.ne.s32.totalorder %s73, %s76
      %p82 = scmp.eq.s32.totalorder %s19, 0
      %p83 = por %p81, %p82
      %p84 = scmp.ne.s32.totalorder %s73, %s76
      %p85 = scmp.eq.s32.totalorder %s24, 180
      %p86 = por %p84, %p85
      %p87 = scmp.ne.s32.totalorder %s76, %s77
      %p88 = scmp.eq.s32.totalorder %s24, 0
      %p89 = por %p87, %p88
      %p90 = scmp.ne.s32.totalorder %s76, %s77
      %p91 = scmp.eq.s32.totalorder %s25, 180
      %p92 = por %p90, %p91
      %p94 = scmp.ne.s32.totalorder %s77, %s93
      %p95 = scmp.eq.s32.totalorder %s25, 0
      %p96 = por %p94, %p95
      %s97 = sadd.s32 %s27, 2
      %s98 = sadd.s32 %s34, 2
      %s99 = ssub.s32 %s26, %s38
      %s100 = ssub.s32 %s97, %s98
      %s101 = sor.u32 %s99, %s100
      %p102 = scmp.eq.s32.totalorder %s101, 0
      %s104 = sadd.s32 %s103, 1
      %s105 = scalar_select %p102, %s103, %s104
      %p108 = pneg %p102
      %p109 = scmp.eq.s32.totalorder %s19, 180
      %p110 = por %p108, %p109
      %p111 = scmp.ne.s32.totalorder %s103, %s106
      %p112 = scmp.eq.s32.totalorder %s19, 0
      %p113 = por %p111, %p112
      %p114 = scmp.ne.s32.totalorder %s103, %s106
      %p115 = scmp.eq.s32.totalorder %s24, 180
      %p116 = por %p114, %p115
      %p117 = scmp.ne.s32.totalorder %s106, %s107
      %p118 = scmp.eq.s32.totalorder %s24, 0
      %p119 = por %p117, %p118
      %p120 = scmp.ne.s32.totalorder %s106, %s107
      %p121 = scmp.eq.s32.totalorder %s25, 180
      %p122 = por %p120, %p121
      %p124 = scmp.ne.s32.totalorder %s107, %s123
      %p125 = scmp.eq.s32.totalorder %s25, 0
      %p126 = por %p124, %p125
      %s128 = sadd.s32 %s127, 1
      %p131 = scmp.eq.s32.totalorder %s19, 180
      %p132 = scmp.ne.s32.totalorder %s127, %s129
      %p133 = scmp.eq.s32.totalorder %s19, 0
      %p134 = por %p132, %p133
      %p135 = scmp.ne.s32.totalorder %s127, %s129
      %p136 = scmp.eq.s32.totalorder %s24, 180
      %p137 = por %p135, %p136
      %p138 = scmp.ne.s32.totalorder %s129, %s130
      %p139 = scmp.eq.s32.totalorder %s24, 0
      %p140 = por %p138, %p139
      %p141 = scmp.ne.s32.totalorder %s129, %s130
      %p142 = scmp.eq.s32.totalorder %s25, 180
      %p143 = por %p141, %p142
      %p145 = scmp.ne.s32.totalorder %s130, %s144
      %p146 = scmp.eq.s32.totalorder %s25, 0
      %p147 = por %p145, %p146
      %s148 = ssub.s32 %s26, %s38
      %s149 = ssub.s32 %s27, %s34
      %s150 = sor.u32 %s148, %s149
      %p151 = scmp.eq.s32.totalorder %s150, 0
      %s153 = sadd.s32 %s152, 1
      %s154 = scalar_select %p151, %s152, %s153
      %p157 = pneg %p151
      %p158 = scmp.eq.s32.totalorder %s19, 180
      %p159 = por %p157, %p158
      %p160 = scmp.ne.s32.totalorder %s152, %s155
      %p161 = scmp.eq.s32.totalorder %s19, 0
      %p162 = por %p160, %p161
      %p163 = scmp.ne.s32.totalorder %s152, %s155
      %p164 = scmp.eq.s32.totalorder %s24, 180
      %p165 = por %p163, %p164
      %p166 = scmp.ne.s32.totalorder %s155, %s156
      %p167 = scmp.eq.s32.totalorder %s24, 0
      %p168 = por %p166, %p167
      %p169 = scmp.ne.s32.totalorder %s155, %s156
      %p170 = scmp.eq.s32.totalorder %s25, 180
      %p171 = por %p169, %p170
      %p173 = scmp.ne.s32.totalorder %s156, %s172
      %p174 = scmp.eq.s32.totalorder %s25, 0
      %p175 = por %p173, %p174
      %p176 = scmp.le.s32.totalorder 1, %s19
      %p177 = scmp.lt.s32.totalorder %s19, 182
      %p178 = pnand %p176, %p177
      %p179 = pneg %p178
      // Predicated region
      $region9: #{conv3x3.1} parent=5 // pred_check
        _
      $region10: #{conv3x3.1} parent=5 // pred_check_branch
        %181 = sbr.rel (%p178) target = $region12
      $region11: #{conv3x3.1} parent=5 // pred_region
        %s182 = ssub.s32 %s19, 1
        // Predicated region
        $region13: #{conv3x3.1} parent=11 // pred_check
          %p183 = pneg %p140
        $region14: #{conv3x3.1} parent=11 // pred_check_branch
          %185 = sbr.rel (%p183) target = $region16
        $region15: #{conv3x3.1} parent=11 // pred_region
          _
        $region16: #{conv3x3.1} parent=11 // pred_fallthru
          _
      $region12: #{conv3x3.1} parent=5 // pred_fallthru
        _
      %p186 = scmp.lt.s32.totalorder %s19, 181
      // Predicated region
      $region17: #{conv3x3.1} parent=5 // pred_check
        %p187 = pneg %p186
      $region18: #{conv3x3.1} parent=5 // pred_check_branch
        %189 = sbr.rel (%p187) target = $region20
      $region19: #{conv3x3.1} parent=5 // pred_region
        // Predicated region
        $region21: #{conv3x3.1} parent=19 // pred_check
          %p190 = pneg %p53
        $region22: #{conv3x3.1} parent=19 // pred_check_branch
          %192 = sbr.rel (%p190) target = $region24
        $region23: #{conv3x3.1} parent=19 // pred_region
          %s193 = sand.u32 %s43, 1
          %s194 = scalar_lea.sflag [#allocation3], %s193
          %s195 = sand.u32 %s43, 1
          %s196 = smul.addr %s195, 2928
          %s197 = scalar_lea.vmem [#allocation2], %s196
          %199 = vsyncadd %s194, 0
          %s200 = smul.addr %s27, 366
          %s201 = smul.addr %s26, 66978
          %s202 = sadd.s32 %s200, %s201
          %s203 = smul.addr %s202, 8
          %s204 = scalar_lea.hbm %s0, %s203
          %s205 = sshll.u32 %s204, 4
          %s206 = int_to_ptr.hbm [resolvable:$true] %s205
          %s207 = sshll.u32 %s197, 4
          %s208 = int_to_ptr.vmem [resolvable:$true] %s207
          %213 = dma.hbm_to_vmem [thread:$0]  %s206, 46848, %s208, %s194, 256, 256, 16
        $region24: #{conv3x3.1} parent=19 // pred_fallthru
          _
        // Predicated region
        $region25: #{conv3x3.1} parent=19 // pred_check
          %p214 = pneg %p83
        $region26: #{conv3x3.1} parent=19 // pred_check_branch
          %216 = sbr.rel (%p214) target = $region28
        $region27: #{conv3x3.1} parent=19 // pred_region
          %s217 = sand.u32 %s19, 1
          %s218 = scalar_lea.sflag [#allocation6], %s217
          %s219 = sand.u32 %s73, 1
          %s220 = smul.addr %s219, 2928
          %s221 = scalar_lea.vmem [#allocation5], %s220
          %s222 = sadd.s32 %s27, 1
          %224 = vsyncadd %s218, 0
          %s225 = smul.addr %s222, 366
          %s226 = smul.addr %s26, 66978
          %s227 = sadd.s32 %s225, %s226
          %s228 = smul.addr %s227, 8
          %s229 = scalar_lea.hbm %s1, %s228
          %s230 = sshll.u32 %s229, 4
          %s231 = int_to_ptr.hbm [resolvable:$true] %s230
          %s232 = sshll.u32 %s221, 4
          %s233 = int_to_ptr.vmem [resolvable:$true] %s232
          %238 = dma.hbm_to_vmem [thread:$0]  %s231, 46848, %s233, %s218, 256, 256, 16
        $region28: #{conv3x3.1} parent=19 // pred_fallthru
          _
        // Predicated region
        $region29: #{conv3x3.1} parent=19 // pred_check
          %p239 = pneg %p113
        $region30: #{conv3x3.1} parent=19 // pred_check_branch
          %241 = sbr.rel (%p239) target = $region32
        $region31: #{conv3x3.1} parent=19 // pred_region
          %s242 = sand.u32 %s19, 1
          %s243 = scalar_lea.sflag [#allocation6], %s242
          %s244 = sand.u32 %s103, 1
          %s245 = smul.addr %s244, 2928
          %s246 = scalar_lea.vmem [#allocation7], %s245
          %s247 = sadd.s32 %s27, 2
          %249 = vsyncadd %s243, 0
          %s250 = smul.addr %s247, 366
          %s251 = smul.addr %s26, 66978
          %s252 = sadd.s32 %s250, %s251
          %s253 = smul.addr %s252, 8
          %s254 = scalar_lea.hbm %s2, %s253
          %s255 = sshll.u32 %s254, 4
          %s256 = int_to_ptr.hbm [resolvable:$true] %s255
          %s257 = sshll.u32 %s246, 4
          %s258 = int_to_ptr.vmem [resolvable:$true] %s257
          %263 = dma.hbm_to_vmem [thread:$0]  %s256, 46848, %s258, %s243, 256, 256, 16
        $region32: #{conv3x3.1} parent=19 // pred_fallthru
          _
      $region20: #{conv3x3.1} parent=5 // pred_fallthru
        _
      %p264 = scmp.le.s32.totalorder 1, %s19
      %p265 = scmp.lt.s32.totalorder %s19, 182
      %p266 = pnand %p264, %p265
      %p267 = pneg %p266
      // Predicated region
      $region33: #{conv3x3.1} parent=5 // pred_check
        _
      $region34: #{conv3x3.1} parent=5 // pred_check_branch
        %269 = sbr.rel (%p266) target = $region36
      $region35: #{conv3x3.1} parent=5 // pred_region
        %s270 = ssub.s32 %s19, 1
        %s271 = sand.u32 %s46, 1
        %s272 = scalar_lea.sflag [#allocation3], %s271
        %s273 = sand.u32 %s46, 1
        %s274 = smul.addr %s273, 2928
        %s275 = scalar_lea.vmem [#allocation2], %s274
        // Predicated region
        $region37: #{conv3x3.1} parent=35 // pred_check
          %p276 = pneg %p59
        $region38: #{conv3x3.1} parent=35 // pred_check_branch
          %278 = sbr.rel (%p276) target = $region40
        $region39: #{conv3x3.1} parent=35 // pred_region
          %280 = dma.done %s272, 46848
        $region40: #{conv3x3.1} parent=35 // pred_fallthru
          _
        %s281 = sand.u32 %s24, 1
        %s282 = scalar_lea.sflag [#allocation6], %s281
        %s283 = sand.u32 %s76, 1
        %s284 = smul.addr %s283, 2928
        %s285 = scalar_lea.vmem [#allocation5], %s284
        // Predicated region
        $region41: #{conv3x3.1} parent=35 // pred_check
          %p286 = pneg %p89
        $region42: #{conv3x3.1} parent=35 // pred_check_branch
          %288 = sbr.rel (%p286) target = $region44
        $region43: #{conv3x3.1} parent=35 // pred_region
          %290 = dma.done %s282, 46848
        $region44: #{conv3x3.1} parent=35 // pred_fallthru
          _
        %s291 = sand.u32 %s24, 1
        %s292 = scalar_lea.sflag [#allocation6], %s291
        %s293 = sand.u32 %s106, 1
        %s294 = smul.addr %s293, 2928
        %s295 = scalar_lea.vmem [#allocation7], %s294
        // Predicated region
        $region45: #{conv3x3.1} parent=35 // pred_check
          %p296 = pneg %p119
        $region46: #{conv3x3.1} parent=35 // pred_check_branch
          %298 = sbr.rel (%p296) target = $region48
        $region47: #{conv3x3.1} parent=35 // pred_region
          %300 = dma.done %s292, 46848
        $region48: #{conv3x3.1} parent=35 // pred_fallthru
          _
        %s301 = sand.u32 %s46, 1
        %s302 = scalar_lea.sflag [#allocation3], %s301
        %s303 = sand.u32 %s46, 1
        %s304 = smul.addr %s303, 2928
        %s305 = scalar_lea.vmem [#allocation2], %s304
        %p306 = pneg %p59
        %p307 = pneg %p56
        %s308 = sand.u32 %s24, 1
        %s309 = scalar_lea.sflag [#allocation6], %s308
        %s310 = sand.u32 %s76, 1
        %s311 = smul.addr %s310, 2928
        %s312 = scalar_lea.vmem [#allocation5], %s311
        %p313 = pneg %p89
        %p314 = pneg %p86
        %s315 = sand.u32 %s24, 1
        %s316 = scalar_lea.sflag [#allocation6], %s315
        %s317 = sand.u32 %s106, 1
        %s318 = smul.addr %s317, 2928
        %s319 = scalar_lea.vmem [#allocation7], %s318
        %p320 = pneg %p119
        %p321 = pneg %p116
        %p322 = pneg %p140
        %p323 = pneg %p137
        %p324 = pneg %p168
        %p325 = pneg %p165
        %s326 = sand.u32 %s155, 1
        %s327 = scalar_lea.sflag [#allocation4], %s326
        %s328 = sand.u32 %s155, 1
        %s329 = smul.addr %s328, 2896
        %s330 = scalar_lea.vmem [#allocation8], %s329
        %s331 = sadd.s32 %s29, 1
        %s332 = sadd.s32 %s29, 2
        %v333 = vld [vmem:[%s3] sm:$0xff]
        %v334 = vld [vmem:[%s3 + $0x8] sm:$0xff]
        loop: start=0, step=1, limit=181
        $region49: #{conv3x3.1} parent=35 // loop_pre_header
          _
        $region50: #{conv3x3.1} parent=35 // loop_header
          %s336 = sphi 0, %s340
          %p337 = scmp.ge.s32.totalorder %s336, 181
        $region51: #{conv3x3.1} parent=35 // loop_header_branch
          %339 = sbr.rel (%p337) target = $region55
        $region52: #{conv3x3.1} parent=35 // loop_body
          %s341 = smul.u32 %s336, 2
          %s342 = smul.addr %s341, 8
          %s343 = scalar_lea.vmem %s275, %s342 [#allocation2]
          %v344 = vld [vmem:[%s343] sm:$0xff]
          %v345 = vld [vmem:[%s343 + $0x8] sm:$0xff]
          %s346 = sadd.s32 %s336, 1
          %s347 = smul.u32 %s346, 2
          %s348 = smul.addr %s347, 8
          %s349 = scalar_lea.vmem %s275, %s348 [#allocation2]
          %v350 = vld [vmem:[%s349] sm:$0xff]
          %v351 = vld [vmem:[%s349 + $0x8] sm:$0xff]
          %s352 = sadd.s32 %s336, 2
          %s353 = smul.u32 %s352, 2
          %s354 = smul.addr %s353, 8
          %s355 = scalar_lea.vmem %s275, %s354 [#allocation2]
          %v356 = vld [vmem:[%s355] sm:$0xff]
          %v357 = vld [vmem:[%s355 + $0x8] sm:$0xff]
          %s358 = smul.addr %s341, 8
          %s359 = scalar_lea.vmem %s285, %s358 [#allocation5]
          %v360 = vld [vmem:[%s359] sm:$0xff]
          %v361 = vld [vmem:[%s359 + $0x8] sm:$0xff]
          %s362 = smul.addr %s347, 8
          %s363 = scalar_lea.vmem %s285, %s362 [#allocation5]
          %v364 = vld [vmem:[%s363] sm:$0xff]
          %v365 = vld [vmem:[%s363 + $0x8] sm:$0xff]
          %s366 = smul.addr %s353, 8
          %s367 = scalar_lea.vmem %s285, %s366 [#allocation5]
          %v368 = vld [vmem:[%s367] sm:$0xff]
          %v369 = vld [vmem:[%s367 + $0x8] sm:$0xff]
          %s370 = smul.addr %s341, 8
          %s371 = scalar_lea.vmem %s295, %s370 [#allocation7]
          %v372 = vld [vmem:[%s371] sm:$0xff]
          %v373 = vld [vmem:[%s371 + $0x8] sm:$0xff]
          %s374 = smul.addr %s347, 8
          %s375 = scalar_lea.vmem %s295, %s374 [#allocation7]
          %v376 = vld [vmem:[%s375] sm:$0xff]
          %v377 = vld [vmem:[%s375 + $0x8] sm:$0xff]
          %s378 = smul.addr %s353, 8
          %s379 = scalar_lea.vmem %s295, %s378 [#allocation7]
          %v380 = vld [vmem:[%s379] sm:$0xff]
          %v381 = vld [vmem:[%s379 + $0x8] sm:$0xff]
          %400 = vrot.lane.b32.xlu0 %v344, 127
          %v401 = vpop.permute.xlu0 %400
          %402 = vrot.lane.b32.xlu0 %v345, 127
          %v403 = vpop.permute.xlu0 %402
          %404 = vrot.lane.b32.xlu0 %v350, 127
          %v405 = vpop.permute.xlu0 %404
          %406 = vrot.lane.b32.xlu0 %v351, 127
          %v407 = vpop.permute.xlu0 %406
          %408 = vrot.lane.b32.xlu0 %v356, 127
          %v409 = vpop.permute.xlu0 %408
          %410 = vrot.lane.b32.xlu0 %v357, 127
          %v411 = vpop.permute.xlu0 %410
          %412 = vrot.lane.b32.xlu0 %v360, 127
          %v413 = vpop.permute.xlu0 %412
          %414 = vrot.lane.b32.xlu0 %v361, 127
          %v415 = vpop.permute.xlu0 %414
          %416 = vrot.lane.b32.xlu0 %v364, 127
          %v417 = vpop.permute.xlu0 %416
          %418 = vrot.lane.b32.xlu0 %v365, 127
          %v419 = vpop.permute.xlu0 %418
          %420 = vrot.lane.b32.xlu0 %v368, 127
          %v421 = vpop.permute.xlu0 %420
          %422 = vrot.lane.b32.xlu0 %v369, 127
          %v423 = vpop.permute.xlu0 %422
          %424 = vrot.lane.b32.xlu0 %v372, 127
          %v425 = vpop.permute.xlu0 %424
          %426 = vrot.lane.b32.xlu0 %v373, 127
          %v427 = vpop.permute.xlu0 %426
          %428 = vrot.lane.b32.xlu0 %v376, 127
          %v429 = vpop.permute.xlu0 %428
          %430 = vrot.lane.b32.xlu0 %v377, 127
          %v431 = vpop.permute.xlu0 %430
          %432 = vrot.lane.b32.xlu0 %v380, 127
          %v433 = vpop.permute.xlu0 %432
          %434 = vrot.lane.b32.xlu0 %v381, 127
          %v435 = vpop.permute.xlu0 %434
          %vm436 = vcmask 1039360
          %v437 = vsel %vm436, %v401, %v403
          %v438 = vsel %vm436, %v405, %v407
          %v439 = vsel %vm436, %v409, %v411
          %v440 = vsel %vm436, %v413, %v415
          %v441 = vsel %vm436, %v417, %v419
          %v442 = vsel %vm436, %v421, %v423
          %v443 = vsel %vm436, %v425, %v427
          %v444 = vsel %vm436, %v429, %v431
          %v445 = vsel %vm436, %v433, %v435
          %464 = vrot.lane.b32.xlu0 %v344, 126
          %v465 = vpop.permute.xlu0 %464
          %466 = vrot.lane.b32.xlu0 %v345, 126
          %v467 = vpop.permute.xlu0 %466
          %468 = vrot.lane.b32.xlu0 %v350, 126
          %v469 = vpop.permute.xlu0 %468
          %470 = vrot.lane.b32.xlu0 %v351, 126
          %v471 = vpop.permute.xlu0 %470
          %472 = vrot.lane.b32.xlu0 %v356, 126
          %v473 = vpop.permute.xlu0 %472
          %474 = vrot.lane.b32.xlu0 %v357, 126
          %v475 = vpop.permute.xlu0 %474
          %476 = vrot.lane.b32.xlu0 %v360, 126
          %v477 = vpop.permute.xlu0 %476
          %478 = vrot.lane.b32.xlu0 %v361, 126
          %v479 = vpop.permute.xlu0 %478
          %480 = vrot.lane.b32.xlu0 %v364, 126
          %v481 = vpop.permute.xlu0 %480
          %482 = vrot.lane.b32.xlu0 %v365, 126
          %v483 = vpop.permute.xlu0 %482
          %484 = vrot.lane.b32.xlu0 %v368, 126
          %v485 = vpop.permute.xlu0 %484
          %486 = vrot.lane.b32.xlu0 %v369, 126
          %v487 = vpop.permute.xlu0 %486
          %488 = vrot.lane.b32.xlu0 %v372, 126
          %v489 = vpop.permute.xlu0 %488
          %490 = vrot.lane.b32.xlu0 %v373, 126
          %v491 = vpop.permute.xlu0 %490
          %492 = vrot.lane.b32.xlu0 %v376, 126
          %v493 = vpop.permute.xlu0 %492
          %494 = vrot.lane.b32.xlu0 %v377, 126
          %v495 = vpop.permute.xlu0 %494
          %496 = vrot.lane.b32.xlu0 %v380, 126
          %v497 = vpop.permute.xlu0 %496
          %498 = vrot.lane.b32.xlu0 %v381, 126
          %v499 = vpop.permute.xlu0 %498
          %vm500 = vcmask 1031168
          %v501 = vsel %vm500, %v465, %v467
          %v502 = vsel %vm500, %v469, %v471
          %v503 = vsel %vm500, %v473, %v475
          %v504 = vsel %vm500, %v477, %v479
          %v505 = vsel %vm500, %v481, %v483
          %v506 = vsel %vm500, %v485, %v487
          %v507 = vsel %vm500, %v489, %v491
          %v508 = vsel %vm500, %v493, %v495
          %v509 = vsel %vm500, %v497, %v499
          %vm528 = vcmask 719872
          %v530 = vsel %vm528, %v334, 0
          %532 = vmatpush.msra.mxu0 %v443
          %533 = vmatpush.msra.mxu0 %v442
          %534 = vmatpush.msra.mxu0 %v441
          %535 = vmatpush.msra.mxu0 %v440
          %536 = vmatpush.msra.mxu0 %v439
          %537 = vmatpush.msra.mxu0 %v438
          %538 = vmatpush.msra.mxu0 %v437
          %539 = vmatpush.msra.mxu0 %v380
          %540 = vmatpush.msra.mxu0 %v376
          %541 = vmatpush.msra.mxu0 %v372
          %542 = vmatpush.msra.mxu0 %v368
          %543 = vmatpush.msra.mxu0 %v364
          %544 = vmatpush.msra.mxu0 %v360
          %545 = vmatpush.msra.mxu0 %v356
          %546 = vmatpush.msra.mxu0 %v350
          %547 = vmatpush.msra.mxu0 %v344
          %548 = vmatmul.f32.gmra.mxu0 %v333
          %v549 = vpop.f32.mrf.mxu0
          %v550 = vadd.f32 0.0, %v549
          %551 = vdwg.mxu0
          %552 = vmatpush.msra.mxu0 0.0
          %553 = vmatpush.msra.mxu0 0.0
          %554 = vmatpush.msra.mxu0 0.0
          %555 = vmatpush.msra.mxu0 0.0
          %556 = vmatpush.msra.mxu0 0.0
          %557 = vmatpush.msra.mxu0 %v509
          %558 = vmatpush.msra.mxu0 %v508
          %559 = vmatpush.msra.mxu0 %v507
          %560 = vmatpush.msra.mxu0 %v506
          %561 = vmatpush.msra.mxu0 %v505
          %562 = vmatpush.msra.mxu0 %v504
          %563 = vmatpush.msra.mxu0 %v503
          %564 = vmatpush.msra.mxu0 %v502
          %565 = vmatpush.msra.mxu0 %v501
          %566 = vmatpush.msra.mxu0 %v445
          %567 = vmatpush.msra.mxu0 %v444
          %568 = vmatmul.f32.gmra.mxu0 %v530
          %v569 = vpop.f32.mrf.mxu0
          %v570 = vadd.f32 %v550, %v569
          %571 = vdwg.mxu0
          %572 = vmatpush.msra.mxu0 %v427
          %573 = vmatpush.msra.mxu0 %v423
          %574 = vmatpush.msra.mxu0 %v419
          %575 = vmatpush.msra.mxu0 %v415
          %576 = vmatpush.msra.mxu0 %v411
          %577 = vmatpush.msra.mxu0 %v407
          %578 = vmatpush.msra.mxu0 %v403
          %579 = vmatpush.msra.mxu0 %v381
          %580 = vmatpush.msra.mxu0 %v377
          %581 = vmatpush.msra.mxu0 %v373
          %582 = vmatpush.msra.mxu0 %v369
          %583 = vmatpush.msra.mxu0 %v365
          %584 = vmatpush.msra.mxu0 %v361
          %585 = vmatpush.msra.mxu0 %v357
          %586 = vmatpush.msra.mxu0 %v351
          %587 = vmatpush.msra.mxu0 %v345
          %588 = vmatmul.f32.gmra.mxu0 %v333
          %v589 = vpop.f32.mrf.mxu0
          %v590 = vadd.f32 0.0, %v589
          %591 = vdwg.mxu0
          %592 = vmatpush.msra.mxu0 0.0
          %593 = vmatpush.msra.mxu0 0.0
          %594 = vmatpush.msra.mxu0 0.0
          %595 = vmatpush.msra.mxu0 0.0
          %596 = vmatpush.msra.mxu0 0.0
          %597 = vmatpush.msra.mxu0 %v499
          %598 = vmatpush.msra.mxu0 %v495
          %599 = vmatpush.msra.mxu0 %v491
          %600 = vmatpush.msra.mxu0 %v487
          %601 = vmatpush.msra.mxu0 %v483
          %602 = vmatpush.msra.mxu0 %v479
          %603 = vmatpush.msra.mxu0 %v475
          %604 = vmatpush.msra.mxu0 %v471
          %605 = vmatpush.msra.mxu0 %v467
          %606 = vmatpush.msra.mxu0 %v435
          %607 = vmatpush.msra.mxu0 %v431
          %608 = vmatmul.f32.gmra.mxu0 %v530
          %v609 = vpop.f32.mrf.mxu0
          %v610 = vadd.f32 %v590, %v609
          %611 = vdwg.mxu0
          %s612 = smul.addr %s341, 8
          %s613 = scalar_lea.vmem %s330, %s612 [#allocation8]
          %614 = vst [vmem:[%s613] sm:$0xff] %v570
          %vm615 = vcmask 433152
          %616 = vst.msk [vmem:[%s613 + $0x8] sm:$0xff] %vm615, %v610
        $region53: #{conv3x3.1} parent=35 // loop_footer
          %s340 = sadd.s32 1, %s336
        $region54: #{conv3x3.1} parent=35 // loop_footer_branch
          %335 = sbr.rel target = $region50
        $region55: #{conv3x3.1} parent=35 // loop_exit
          _
        %s617 = sand.u32 %s155, 1
        %s618 = scalar_lea.sflag [#allocation4], %s617
        %s619 = sand.u32 %s155, 1
        %s620 = smul.addr %s619, 2896
        %s621 = scalar_lea.vmem [#allocation8], %s620
        // Predicated region
        $region56: #{conv3x3.1} parent=35 // pred_check
          %p622 = pneg %p165
        $region57: #{conv3x3.1} parent=35 // pred_check_branch
          %624 = sbr.rel (%p622) target = $region59
        $region58: #{conv3x3.1} parent=35 // pred_region
          %626 = vsyncadd %s618, 0
          %s627 = smul.addr %s29, 362
          %s628 = smul.addr %s28, 65522
          %s629 = sadd.s32 %s627, %s628
          %s630 = smul.addr %s629, 8
          %s631 = scalar_lea.hbm %s4, %s630
          %s632 = sshll.u32 %s621, 4
          %s633 = int_to_ptr.vmem [resolvable:$true] %s632
          %s634 = sshll.u32 %s631, 4
          %s635 = int_to_ptr.hbm [resolvable:$true] %s634
          %640 = dma.vmem_to_hbm [thread:$0]  %s633, 46336, %s635, %s618, 256, 256, 16
        $region59: #{conv3x3.1} parent=35 // pred_fallthru
          _
      $region36: #{conv3x3.1} parent=5 // pred_fallthru
        _
      %p641 = scmp.le.s32.totalorder 2, %s19
      // Predicated region
      $region60: #{conv3x3.1} parent=5 // pred_check
        %p642 = pneg %p641
      $region61: #{conv3x3.1} parent=5 // pred_check_branch
        %644 = sbr.rel (%p642) target = $region63
      $region62: #{conv3x3.1} parent=5 // pred_region
        %s645 = ssub.s32 %s19, 2
        // Predicated region
        $region64: #{conv3x3.1} parent=62 // pred_check
          %p646 = pneg %p171
        $region65: #{conv3x3.1} parent=62 // pred_check_branch
          %648 = sbr.rel (%p646) target = $region67
        $region66: #{conv3x3.1} parent=62 // pred_region
          %s649 = sand.u32 %s156, 1
          %s650 = scalar_lea.sflag [#allocation4], %s649
          %s651 = sand.u32 %s156, 1
          %s652 = smul.addr %s651, 2896
          %s653 = scalar_lea.vmem [#allocation8], %s652
          %655 = dma.done %s650, 46336
        $region67: #{conv3x3.1} parent=62 // pred_fallthru
          _
      $region63: #{conv3x3.1} parent=5 // pred_fallthru
        _
    $region6: #{conv3x3.1} parent=1 // loop_footer
      %s23 = sadd.s32 1, %s19
    $region7: #{conv3x3.1} parent=1 // loop_footer_branch
      %18 = sbr.rel target = $region3
    $region8: #{conv3x3.1} parent=1 // loop_exit
      _
    %656 = vsyncpa [#allocation3], 1
    %s657 = scalar_lea.sflag [#allocation3], 1
    %658 = vsyncpa %s657, 1
    %659 = vsyncpa [#allocation6], 1
    %s660 = scalar_lea.sflag [#allocation6], 1
    %661 = vsyncpa %s660, 1
    %662 = vsyncpa [#allocation4], 1
    %s663 = scalar_lea.sflag [#allocation4], 1
    %664 = vsyncpa %s663, 1

</llo_original>
